<compile_context>
chip_gen: v7x
topology: tpu7x:2x2x1
jax: 0.10.0
libtpu: 0.0.40
codegen_flags: <defaults>
</compile_context>

<pallas_src>
import jax
import jax.numpy as jnp
from jax.experimental import pallas as pl
from jax.experimental.pallas import tpu as pltpu


# ---------------------------------------------------------------------------
# Path 1: weights fully resident in VMEM.
# ---------------------------------------------------------------------------
def _ffn_resident_kernel(x_ref, w1_ref, b1_ref, w2_ref, b2_ref, o_ref):
    x = x_ref[...]                                              # (tm, D) f32
    h = jnp.dot(x.astype(jnp.bfloat16), w1_ref[...],
                preferred_element_type=jnp.float32) + b1_ref[...]
    h = jnp.maximum(h, 0.0)                                     # ReLU (f32, VPU)
    # Dropout(p): identity in eval mode.
    y = jnp.dot(h.astype(jnp.bfloat16), w2_ref[...],
                preferred_element_type=jnp.float32) + b2_ref[...]
    o_ref[...] = y.astype(o_ref.dtype)


# ---------------------------------------------------------------------------
# Path 2: hidden dimension tiled, f32 accumulator in VMEM scratch.
# ---------------------------------------------------------------------------
def _ffn_hidden_tiled_kernel(x_ref, w1_ref, b1_ref, w2_ref, b2_ref, o_ref,
                             acc_ref):
    h_idx = pl.program_id(1)

    @pl.when(h_idx == 0)
    def _():
        acc_ref[...] = jnp.zeros_like(acc_ref)

    x = x_ref[...]                                              # (tm, D)
    # ReLU is elementwise over hidden units, so per-hidden-slice ReLU is exact.
    h = jnp.dot(x.astype(jnp.bfloat16), w1_ref[...],
                preferred_element_type=jnp.float32) + b1_ref[...]
    h = jnp.maximum(h, 0.0)
    acc_ref[...] += jnp.dot(h.astype(jnp.bfloat16), w2_ref[...],
                            preferred_element_type=jnp.float32)

    @pl.when(h_idx == pl.num_programs(1) - 1)
    def _():
        o_ref[...] = (acc_ref[...] + b2_ref[...]).astype(o_ref.dtype)


def feedforward(x, params, *, tm=256, th=None):
    """FeedForward forward pass.

    x:      (..., d_model) float32
    params: w1 (D, H) bf16, b1 (H,) f32, w2 (H, D) bf16, b2 (D,) f32
            (weights stored as (in, out) == torch W.T)
    tm:     row tile (tokens per grid step)
    th:     hidden tile; None => auto (resident weights if they fit in VMEM)
    """
    orig_shape = x.shape
    D = orig_shape[-1]
    H = params["w1"].shape[1]
    N = 1
    for s in orig_shape[:-1]:
        N *= s
    xf = x.reshape(N, D)

    # Row tile: multiple of 8 sublanes, clamped to (padded) N.
    tm = min(tm, max(8, ((N + 7) // 8) * 8))
    tm = max(8, (tm // 8) * 8)
    grid_m = pl.cdiv(N, tm)            # ragged last tile is safe: rows independent

    w1, w2 = params["w1"], params["w2"]
    b1 = params["b1"].reshape(1, H)
    b2 = params["b2"].reshape(1, D)

    w_bytes = (w1.size * w1.dtype.itemsize + w2.size * w2.dtype.itemsize
               + (H + D) * 4)
    use_resident = (th is None) and (w_bytes <= (32 << 20))

    if use_resident:
        # VMEM budget: resident weights + double-buffered x/out tiles
        # + the (tm, H) intermediate + headroom.
        act_bytes = 2 * (2 * tm * D * xf.dtype.itemsize)
        hidden_bytes = 2 * tm * H * 4
        vmem_limit = int(min(max(w_bytes + act_bytes + hidden_bytes + (4 << 20),
                                 16 << 20), 64 << 20))
        resident = pl.BlockSpec(memory_space=pltpu.MemorySpace.VMEM)
        out = pl.pallas_call(
            _ffn_resident_kernel,
            out_shape=jax.ShapeDtypeStruct((N, D), x.dtype),
            grid=(grid_m,),
            in_specs=[
                pl.BlockSpec((tm, D), lambda i: (i, 0)),   # x rows (pipelined)
                resident,                                   # W1 (D, H) bf16
                resident,                                   # b1 (1, H) f32
                resident,                                   # W2 (H, D) bf16
                resident,                                   # b2 (1, D) f32
            ],
            out_specs=pl.BlockSpec((tm, D), lambda i: (i, 0)),
            compiler_params=pltpu.CompilerParams(
                dimension_semantics=("parallel",),
                vmem_limit_bytes=vmem_limit),
        )(xf, w1, b1, w2, b2)
    else:
        if th is None:
            th = 512
        th = min(th, H)
        assert H % th == 0, f"hidden dim {H} must be divisible by tile {th}"
        grid_h = H // th
        out = pl.pallas_call(
            _ffn_hidden_tiled_kernel,
            out_shape=jax.ShapeDtypeStruct((N, D), x.dtype),
            grid=(grid_m, grid_h),
            in_specs=[
                pl.BlockSpec((tm, D), lambda i, h: (i, 0)),   # x (revisited over h)
                pl.BlockSpec((D, th), lambda i, h: (0, h)),   # W1 column slice
                pl.BlockSpec((1, th), lambda i, h: (0, h)),   # b1 slice
                pl.BlockSpec((th, D), lambda i, h: (h, 0)),   # W2 row slice
                pl.BlockSpec((1, D),  lambda i, h: (0, 0)),   # b2
            ],
            out_specs=pl.BlockSpec((tm, D), lambda i, h: (i, 0)),
            scratch_shapes=[pltpu.VMEM((tm, D), jnp.float32)],
            compiler_params=pltpu.CompilerParams(
                dimension_semantics=("parallel", "arbitrary")),
        )(xf, w1, b1, w2, b2)

    return out.reshape(orig_shape)


def reference(x, p):
    """Pure-JAX reference mirroring the kernel numerics (bf16 MXU inputs, f32 acc)."""
    h = jnp.dot(x.astype(jnp.bfloat16), p["w1"],
                preferred_element_type=jnp.float32) + p["b1"]
    h = jnp.maximum(h, 0.0)
    y = jnp.dot(h.astype(jnp.bfloat16), p["w2"],
                preferred_element_type=jnp.float32) + p["b2"]
    return y


if __name__ == "__main__":
    # Small-but-lane-dense demo shapes: d_model multiple of 128, 2 row tiles.
    B, S, D, H = 4, 128, 128, 256
    key = jax.random.PRNGKey(0)
    kx, k1, kb1, k2, kb2 = jax.random.split(key, 5)

    x = jax.random.normal(kx, (B, S, D), dtype=jnp.float32)

    params = {
        # Linear weights stored as (in, out) == torch W.T, cast to bf16 for the MXU.
        "w1": (jax.random.normal(k1, (D, H), dtype=jnp.float32) * 0.1
               ).astype(jnp.bfloat16),
        "b1": jax.random.normal(kb1, (H,), dtype=jnp.float32) * 0.1,
        "w2": (jax.random.normal(k2, (H, D), dtype=jnp.float32) * 0.1
               ).astype(jnp.bfloat16),
        "b2": jax.random.normal(kb2, (D,), dtype=jnp.float32) * 0.1,
    }

    ref = reference(x, params)

    # Path 1: VMEM-resident weights (default for these shapes).
    out_res = jax.block_until_ready(feedforward(x, params, tm=256))
    assert out_res.shape == (B, S, D)
    err_res = float(jnp.max(jnp.abs(out_res - ref)))
    assert jnp.allclose(out_res, ref, atol=2e-3, rtol=2e-3), err_res

    # Path 2: hidden-dim tiling with an f32 VMEM accumulator (for large H).
    out_tiled = jax.block_until_ready(feedforward(x, params, tm=256, th=128))
    err_tiled = float(jnp.max(jnp.abs(out_tiled - ref)))
    assert jnp.allclose(out_tiled, ref, atol=2e-3, rtol=2e-3), err_tiled

    print("KERNEL_OK")
</pallas_src>

<mosaic_0001>
module attributes {stable_mosaic.version = 11 : i64} {
  func.func @_ffn_resident_kernel(%arg0: i32, %arg1: memref<256x128xf32, #tpu.memory_space<vmem>>, %arg2: memref<128x256xbf16, #tpu.memory_space<vmem>>, %arg3: memref<1x256xf32, #tpu.memory_space<vmem>>, %arg4: memref<256x128xbf16, #tpu.memory_space<vmem>>, %arg5: memref<1x128xf32, #tpu.memory_space<vmem>>, %arg6: memref<256x128xf32, #tpu.memory_space<vmem>>) attributes {dimension_semantics = [#tpu.dimension_semantics<parallel>], iteration_bounds = array<i64: 2>, scalar_prefetch = 0 : i64, scratch_operands = 0 : i64, tpu.core_type = #tpu.core_type<tc>, window_params = [{transform_indices = @transform_0, window_bounds = array<i64: 256, 128>}, {pipeline_mode = #tpu.pipeline_mode<synchronous>, transform_indices = @transform_1, window_bounds = array<i64: 128, 256>}, {pipeline_mode = #tpu.pipeline_mode<synchronous>, transform_indices = @transform_2, window_bounds = array<i64: 1, 256>}, {pipeline_mode = #tpu.pipeline_mode<synchronous>, transform_indices = @transform_3, window_bounds = array<i64: 256, 128>}, {pipeline_mode = #tpu.pipeline_mode<synchronous>, transform_indices = @transform_4, window_bounds = array<i64: 1, 128>}, {transform_indices = @transform_5, window_bounds = array<i64: 256, 128>}]} {
    %c0 = arith.constant 0 : index
    %c0_0 = arith.constant 0 : index
    %0 = vector.load %arg1[%c0, %c0_0] : memref<256x128xf32, #tpu.memory_space<vmem>>, vector<256x128xf32>
    %1 = arith.truncf %0 : vector<256x128xf32> to vector<256x128xbf16>
    %c0_1 = arith.constant 0 : index
    %c0_2 = arith.constant 0 : index
    %2 = vector.load %arg2[%c0_1, %c0_2] : memref<128x256xbf16, #tpu.memory_space<vmem>>, vector<128x256xbf16>
    %cst = arith.constant dense<0.000000e+00> : vector<256x256xf32>
    %3 = tpu.matmul %1, %2, %cst {dimension_numbers = #tpu.dot_dimension_numbers<[1], [0], [0], [1], [0, 0, 1, 1], [], []>} : vector<256x128xbf16>, vector<128x256xbf16>, vector<256x256xf32> -> vector<256x256xf32>
    %c0_3 = arith.constant 0 : index
    %c0_4 = arith.constant 0 : index
    %4 = vector.load %arg3[%c0_3, %c0_4] : memref<1x256xf32, #tpu.memory_space<vmem>>, vector<1x256xf32>
    %5 = vector.broadcast %4 : vector<1x256xf32> to vector<256x256xf32>
    %6 = arith.addf %3, %5 : vector<256x256xf32>
    %cst_5 = arith.constant 0.000000e+00 : f32
    %7 = vector.broadcast %cst_5 : f32 to vector<256x256xf32>
    %8 = arith.maximumf %6, %7 : vector<256x256xf32>
    %9 = arith.truncf %8 : vector<256x256xf32> to vector<256x256xbf16>
    %c0_6 = arith.constant 0 : index
    %c0_7 = arith.constant 0 : index
    %10 = vector.load %arg4[%c0_6, %c0_7] : memref<256x128xbf16, #tpu.memory_space<vmem>>, vector<256x128xbf16>
    %cst_8 = arith.constant dense<0.000000e+00> : vector<256x128xf32>
    %11 = tpu.matmul %9, %10, %cst_8 {dimension_numbers = #tpu.dot_dimension_numbers<[1], [0], [0], [1], [0, 0, 1, 1], [], []>} : vector<256x256xbf16>, vector<256x128xbf16>, vector<256x128xf32> -> vector<256x128xf32>
    %c0_9 = arith.constant 0 : index
    %c0_10 = arith.constant 0 : index
    %12 = vector.load %arg5[%c0_9, %c0_10] : memref<1x128xf32, #tpu.memory_space<vmem>>, vector<1x128xf32>
    %13 = vector.broadcast %12 : vector<1x128xf32> to vector<256x128xf32>
    %14 = arith.addf %11, %13 : vector<256x128xf32>
    %c0_11 = arith.constant 0 : index
    %c0_12 = arith.constant 0 : index
    %15 = vector.load %arg6[%c0_11, %c0_12] : memref<256x128xf32, #tpu.memory_space<vmem>>, vector<256x128xf32>
    tpu.vector_store %arg6[%c0_11, %c0_12], %14 {strides = array<i32>} : memref<256x128xf32, #tpu.memory_space<vmem>>, vector<256x128xf32>,
    return
  }
  func.func @transform_0(%arg0: i32) -> (i32, i32) {
    %c0_i32 = arith.constant 0 : i32
    %c0_i32_0 = arith.constant 0 : i32
    return %arg0, %c0_i32 : i32, i32
  }
  func.func @transform_1(%arg0: i32) -> (i32, i32) {
    %c0_i32 = arith.constant 0 : i32
    %c0_i32_0 = arith.constant 0 : i32
    %c0_i32_1 = arith.constant 0 : i32
    return %c0_i32, %c0_i32_0 : i32, i32
  }
  func.func @transform_2(%arg0: i32) -> (i32, i32) {
    %c0_i32 = arith.constant 0 : i32
    %c0_i32_0 = arith.constant 0 : i32
    %c0_i32_1 = arith.constant 0 : i32
    return %c0_i32, %c0_i32_0 : i32, i32
  }
  func.func @transform_3(%arg0: i32) -> (i32, i32) {
    %c0_i32 = arith.constant 0 : i32
    %c0_i32_0 = arith.constant 0 : i32
    %c0_i32_1 = arith.constant 0 : i32
    return %c0_i32, %c0_i32_0 : i32, i32
  }
  func.func @transform_4(%arg0: i32) -> (i32, i32) {
    %c0_i32 = arith.constant 0 : i32
    %c0_i32_0 = arith.constant 0 : i32
    %c0_i32_1 = arith.constant 0 : i32
    return %c0_i32, %c0_i32_0 : i32, i32
  }
  func.func @transform_5(%arg0: i32) -> (i32, i32) {
    %c0_i32 = arith.constant 0 : i32
    %c0_i32_0 = arith.constant 0 : i32
    return %arg0, %c0_i32 : i32, i32
  }
}

</mosaic_0001>

<llo_original>
// kernel: tpu_custom_call.1
$region0: #{tpu_custom_call.1}
  #allocation0 [shape = 'u32[]', space=smem, size = 0x4, offset = 0x4, fixed_abs, tag = 'smem constant byte address 0x4 - core index']
  #allocation1 [shape = 'u32[144,128]{1,0:T(1,128)}', space=vmem, size = 0x12000, scoped, tag = 'internal scratch']
  %s0 = inlined_call_operand.hbm [shape: f32[512,128], index: 0, kind: input, shape index: {}]
  %s1 = inlined_call_operand.hbm [shape: bf16[128,256], index: 1, kind: input, shape index: {}]
  %s2 = inlined_call_operand.vmem [shape: f32[1,256], index: 2, kind: input, shape index: {}]
  %s3 = inlined_call_operand.hbm [shape: bf16[256,128], index: 3, kind: input, shape index: {}]
  %s4 = inlined_call_operand.vmem [shape: f32[1,128], index: 4, kind: input, shape index: {}]
  %s5 = inlined_call_operand.hbm [shape: f32[512,128], index: 5, kind: output, shape index: {}]
  %s6 = sld [smem:[#allocation0]]
  $region65: #{tpu_custom_call.1} parent=0
    _
  %s8 = ssub.s32 1, %s6
  %s9 = scalar_select 0, %s8, %s6
  $region1: #{tpu_custom_call.1} parent=0
    #allocation2 [shape = 'u8[262144]{0}', space=vmem, size = 0x40000, scoped, tag = 'input window, operand 0']
    #allocation3 [shape = 's32[2]{0}', space=sflag, size = 0x8, scoped, tag = 'scoped memory for tpu_custom_call.1']
    #allocation4 [shape = 's32[2]{0}', space=sflag, size = 0x8, scoped, tag = 'scoped memory for tpu_custom_call.1']
    #allocation5 [shape = 'u8[65536]{0}', space=vmem, size = 0x10000, scoped, tag = 'input window, operand 1, single buffered']
    #allocation6 [shape = 's32[1]{0}', space=sflag, size = 0x4, scoped, tag = 'scoped memory for tpu_custom_call.1']
    #allocation7 [shape = 'u8[65536]{0}', space=vmem, size = 0x10000, scoped, tag = 'input window, operand 3, single buffered']
    #allocation8 [shape = 'u8[262144]{0}', space=vmem, size = 0x40000, scoped, tag = 'output window, operand 0']
    %10 = vsyncpa [#allocation3], 0
    %s11 = scalar_lea.sflag [#allocation3], 1
    %12 = vsyncpa %s11, 0
    %13 = vsyncpa [#allocation6], 0
    %14 = vsyncpa [#allocation4], 0
    %s15 = scalar_lea.sflag [#allocation4], 1
    %16 = vsyncpa %s15, 0
    loop: start=0, step=1, limit=4
    $region2: #{tpu_custom_call.1} parent=1 // loop_pre_header
      _
    $region3: #{tpu_custom_call.1} parent=1 // loop_header
      %s18 = sphi 0, %s22
      %p19 = scmp.ge.s32.totalorder %s18, 4
      %s28 = sphi 0, %s30
      %s31 = sphi 0, %s28
      %s32 = sphi 0, %s31
      %s48 = sphi 0, %s32
      %s52 = sphi 0, %s52
      %s54 = sphi 0, %s52
      %s55 = sphi 0, %s54
      %s69 = sphi 0, %s55
      %s73 = sphi 0, %s73
      %s75 = sphi 0, %s73
      %s76 = sphi 0, %s75
      %s90 = sphi 0, %s76
      %s94 = sphi 0, %s94
      %s96 = sphi 0, %s94
      %s97 = sphi 0, %s96
      %s111 = sphi 0, %s97
      %s115 = sphi 0, %s115
      %s117 = sphi 0, %s115
      %s118 = sphi 0, %s117
      %s132 = sphi 0, %s118
      %s138 = sphi 0, %s140
      %s141 = sphi 0, %s138
      %s142 = sphi 0, %s141
      %s158 = sphi 0, %s142
    $region4: #{tpu_custom_call.1} parent=1 // loop_header_branch
      %21 = sbr.rel (%p19) target = $region8
    $region5: #{tpu_custom_call.1} parent=1 // loop_body
      %s23 = ssub.s32 %s18, 1
      %s24 = ssub.s32 %s18, 2
      %s25 = sadd.s32 %s18, 1
      %s26 = ssub.s32 %s18, %s25
      %p27 = scmp.eq.s32.totalorder %s26, 0
      %s29 = sadd.s32 %s28, 1
      %s30 = scalar_select %p27, %s28, %s29
      %p33 = pneg %p27
      %p34 = scmp.eq.s32.totalorder %s18, 1
      %p35 = por %p33, %p34
      %p36 = scmp.ne.s32.totalorder %s28, %s31
      %p37 = scmp.eq.s32.totalorder %s18, 0
      %p38 = por %p36, %p37
      %p39 = scmp.ne.s32.totalorder %s28, %s31
      %p40 = scmp.eq.s32.totalorder %s23, 1
      %p41 = por %p39, %p40
      %p42 = scmp.ne.s32.totalorder %s31, %s32
      %p43 = scmp.eq.s32.totalorder %s23, 0
      %p44 = por %p42, %p43
      %p45 = scmp.ne.s32.totalorder %s31, %s32
      %p46 = scmp.eq.s32.totalorder %s24, 1
      %p47 = por %p45, %p46
      %p49 = scmp.ne.s32.totalorder %s32, %s48
      %p50 = scmp.eq.s32.totalorder %s24, 0
      %p51 = por %p49, %p50
      %s53 = sadd.s32 %s52, 1
      %p56 = scmp.eq.s32.totalorder %s18, 1
      %p57 = scmp.ne.s32.totalorder %s52, %s54
      %p58 = scmp.eq.s32.totalorder %s18, 0
      %p59 = por %p57, %p58
      %p60 = scmp.ne.s32.totalorder %s52, %s54
      %p61 = scmp.eq.s32.totalorder %s23, 1
      %p62 = por %p60, %p61
      %p63 = scmp.ne.s32.totalorder %s54, %s55
      %p64 = scmp.eq.s32.totalorder %s23, 0
      %p65 = por %p63, %p64
      %p66 = scmp.ne.s32.totalorder %s54, %s55
      %p67 = scmp.eq.s32.totalorder %s24, 1
      %p68 = por %p66, %p67
      %p70 = scmp.ne.s32.totalorder %s55, %s69
      %p71 = scmp.eq.s32.totalorder %s24, 0
      %p72 = por %p70, %p71
      %s74 = sadd.s32 %s73, 1
      %p77 = scmp.eq.s32.totalorder %s18, 1
      %p78 = scmp.ne.s32.totalorder %s73, %s75
      %p79 = scmp.eq.s32.totalorder %s18, 0
      %p80 = por %p78, %p79
      %p81 = scmp.ne.s32.totalorder %s73, %s75
      %p82 = scmp.eq.s32.totalorder %s23, 1
      %p83 = por %p81, %p82
      %p84 = scmp.ne.s32.totalorder %s75, %s76
      %p85 = scmp.eq.s32.totalorder %s23, 0
      %p86 = por %p84, %p85
      %p87 = scmp.ne.s32.totalorder %s75, %s76
      %p88 = scmp.eq.s32.totalorder %s24, 1
      %p89 = por %p87, %p88
      %p91 = scmp.ne.s32.totalorder %s76, %s90
      %p92 = scmp.eq.s32.totalorder %s24, 0
      %p93 = por %p91, %p92
      %s95 = sadd.s32 %s94, 1
      %p98 = scmp.eq.s32.totalorder %s18, 1
      %p99 = scmp.ne.s32.totalorder %s94, %s96
      %p100 = scmp.eq.s32.totalorder %s18, 0
      %p101 = por %p99, %p100
      %p102 = scmp.ne.s32.totalorder %s94, %s96
      %p103 = scmp.eq.s32.totalorder %s23, 1
      %p104 = por %p102, %p103
      %p105 = scmp.ne.s32.totalorder %s96, %s97
      %p106 = scmp.eq.s32.totalorder %s23, 0
      %p107 = por %p105, %p106
      %p108 = scmp.ne.s32.totalorder %s96, %s97
      %p109 = scmp.eq.s32.totalorder %s24, 1
      %p110 = por %p108, %p109
      %p112 = scmp.ne.s32.totalorder %s97, %s111
      %p113 = scmp.eq.s32.totalorder %s24, 0
      %p114 = por %p112, %p113
      %s116 = sadd.s32 %s115, 1
      %p119 = scmp.eq.s32.totalorder %s18, 1
      %p120 = scmp.ne.s32.totalorder %s115, %s117
      %p121 = scmp.eq.s32.totalorder %s18, 0
      %p122 = por %p120, %p121
      %p123 = scmp.ne.s32.totalorder %s115, %s117
      %p124 = scmp.eq.s32.totalorder %s23, 1
      %p125 = por %p123, %p124
      %p126 = scmp.ne.s32.totalorder %s117, %s118
      %p127 = scmp.eq.s32.totalorder %s23, 0
      %p128 = por %p126, %p127
      %p129 = scmp.ne.s32.totalorder %s117, %s118
      %p130 = scmp.eq.s32.totalorder %s24, 1
      %p131 = por %p129, %p130
      %p133 = scmp.ne.s32.totalorder %s118, %s132
      %p134 = scmp.eq.s32.totalorder %s24, 0
      %p135 = por %p133, %p134
      %s136 = ssub.s32 %s18, %s25
      %p137 = scmp.eq.s32.totalorder %s136, 0
      %s139 = sadd.s32 %s138, 1
      %s140 = scalar_select %p137, %s138, %s139
      %p143 = pneg %p137
      %p144 = scmp.eq.s32.totalorder %s18, 1
      %p145 = por %p143, %p144
      %p146 = scmp.ne.s32.totalorder %s138, %s141
      %p147 = scmp.eq.s32.totalorder %s18, 0
      %p148 = por %p146, %p147
      %p149 = scmp.ne.s32.totalorder %s138, %s141
      %p150 = scmp.eq.s32.totalorder %s23, 1
      %p151 = por %p149, %p150
      %p152 = scmp.ne.s32.totalorder %s141, %s142
      %p153 = scmp.eq.s32.totalorder %s23, 0
      %p154 = por %p152, %p153
      %p155 = scmp.ne.s32.totalorder %s141, %s142
      %p156 = scmp.eq.s32.totalorder %s24, 1
      %p157 = por %p155, %p156
      %p159 = scmp.ne.s32.totalorder %s142, %s158
      %p160 = scmp.eq.s32.totalorder %s24, 0
      %p161 = por %p159, %p160
      %p162 = scmp.le.s32.totalorder 1, %s18
      %p163 = scmp.lt.s32.totalorder %s18, 3
      %p164 = pnand %p162, %p163
      %p165 = pneg %p164
      // Predicated region
      $region9: #{tpu_custom_call.1} parent=5 // pred_check
        _
      $region10: #{tpu_custom_call.1} parent=5 // pred_check_branch
        %167 = sbr.rel (%p164) target = $region12
      $region11: #{tpu_custom_call.1} parent=5 // pred_region
        %s168 = ssub.s32 %s18, 1
        // Predicated region
        $region13: #{tpu_custom_call.1} parent=11 // pred_check
          %p169 = pneg %p65
        $region14: #{tpu_custom_call.1} parent=11 // pred_check_branch
          %171 = sbr.rel (%p169) target = $region16
        $region15: #{tpu_custom_call.1} parent=11 // pred_region
          %s173 = ssub.s32 2048, 2048
          %174 = vsyncadd [#allocation6], %s173
          %s175 = sshll.u32 [#allocation5], 4
          %s176 = int_to_ptr.vmem [resolvable:$true] %s175
          %181 = dma.hbm_to_vmem [thread:$0]  %s1, 2048, %s176, [#allocation6], 128, 128, 8
        $region16: #{tpu_custom_call.1} parent=11 // pred_fallthru
          _
        // Predicated region
        $region17: #{tpu_custom_call.1} parent=11 // pred_check
          %p182 = pneg %p86
        $region18: #{tpu_custom_call.1} parent=11 // pred_check_branch
          %184 = sbr.rel (%p182) target = $region20
        $region19: #{tpu_custom_call.1} parent=11 // pred_region
          _
        $region20: #{tpu_custom_call.1} parent=11 // pred_fallthru
          _
        // Predicated region
        $region21: #{tpu_custom_call.1} parent=11 // pred_check
          %p185 = pneg %p107
        $region22: #{tpu_custom_call.1} parent=11 // pred_check_branch
          %187 = sbr.rel (%p185) target = $region24
        $region23: #{tpu_custom_call.1} parent=11 // pred_region
          %s189 = ssub.s32 2048, 2048
          %190 = vsyncadd [#allocation6], %s189
          %s191 = sshll.u32 [#allocation7], 4
          %s192 = int_to_ptr.vmem [resolvable:$true] %s191
          %197 = dma.hbm_to_vmem [thread:$0]  %s3, 2048, %s192, [#allocation6], 64, 64, 4
        $region24: #{tpu_custom_call.1} parent=11 // pred_fallthru
          _
        // Predicated region
        $region25: #{tpu_custom_call.1} parent=11 // pred_check
          %p198 = pneg %p128
        $region26: #{tpu_custom_call.1} parent=11 // pred_check_branch
          %200 = sbr.rel (%p198) target = $region28
        $region27: #{tpu_custom_call.1} parent=11 // pred_region
          _
        $region28: #{tpu_custom_call.1} parent=11 // pred_fallthru
          _
      $region12: #{tpu_custom_call.1} parent=5 // pred_fallthru
        _
      %p201 = scmp.lt.s32.totalorder %s18, 2
      // Predicated region
      $region29: #{tpu_custom_call.1} parent=5 // pred_check
        %p202 = pneg %p201
      $region30: #{tpu_custom_call.1} parent=5 // pred_check_branch
        %204 = sbr.rel (%p202) target = $region32
      $region31: #{tpu_custom_call.1} parent=5 // pred_region
        // Predicated region
        $region33: #{tpu_custom_call.1} parent=31 // pred_check
          %p205 = pneg %p38
        $region34: #{tpu_custom_call.1} parent=31 // pred_check_branch
          %207 = sbr.rel (%p205) target = $region36
        $region35: #{tpu_custom_call.1} parent=31 // pred_region
          %s208 = sand.u32 %s28, 1
          %s209 = scalar_lea.sflag [#allocation3], %s208
          %s210 = sand.u32 %s28, 1
          %s211 = smul.addr %s210, 256
          %s212 = scalar_lea.vmem [#allocation2], %s211
          %s213 = smul.u32 32, %s18
          %s215 = ssub.s32 4096, 4096
          %216 = vsyncadd %s209, %s215
          %s217 = smul.addr %s213, 128
          %s218 = scalar_lea.hbm %s0, %s217
          %s219 = sshll.u32 %s212, 4
          %s220 = int_to_ptr.vmem [resolvable:$true] %s219
          %225 = dma.hbm_to_vmem [thread:$0]  %s218, 4096, %s220, %s209, 128, 128, 8
        $region36: #{tpu_custom_call.1} parent=31 // pred_fallthru
          _
      $region32: #{tpu_custom_call.1} parent=5 // pred_fallthru
        _
      %p226 = scmp.le.s32.totalorder 1, %s18
      %p227 = scmp.lt.s32.totalorder %s18, 3
      %p228 = pnand %p226, %p227
      %p229 = pneg %p228
      // Predicated region
      $region37: #{tpu_custom_call.1} parent=5 // pred_check
        _
      $region38: #{tpu_custom_call.1} parent=5 // pred_check_branch
        %231 = sbr.rel (%p228) target = $region40
      $region39: #{tpu_custom_call.1} parent=5 // pred_region
        %s232 = ssub.s32 %s18, 1
        %s233 = sand.u32 %s31, 1
        %s234 = scalar_lea.sflag [#allocation3], %s233
        %s235 = sand.u32 %s31, 1
        %s236 = smul.addr %s235, 256
        %s237 = scalar_lea.vmem [#allocation2], %s236
        // Predicated region
        $region41: #{tpu_custom_call.1} parent=39 // pred_check
          %p238 = pneg %p44
        $region42: #{tpu_custom_call.1} parent=39 // pred_check_branch
          %240 = sbr.rel (%p238) target = $region44
        $region43: #{tpu_custom_call.1} parent=39 // pred_region
          %241 = dma.done %s234, 4096
        $region44: #{tpu_custom_call.1} parent=39 // pred_fallthru
          _
        // Predicated region
        $region45: #{tpu_custom_call.1} parent=39 // pred_check
          %p242 = pneg %p65
        $region46: #{tpu_custom_call.1} parent=39 // pred_check_branch
          %244 = sbr.rel (%p242) target = $region48
        $region47: #{tpu_custom_call.1} parent=39 // pred_region
          %245 = dma.done [#allocation6], 2048
        $region48: #{tpu_custom_call.1} parent=39 // pred_fallthru
          _
        // Predicated region
        $region49: #{tpu_custom_call.1} parent=39 // pred_check
          %p246 = pneg %p107
        $region50: #{tpu_custom_call.1} parent=39 // pred_check_branch
          %248 = sbr.rel (%p246) target = $region52
        $region51: #{tpu_custom_call.1} parent=39 // pred_region
          %249 = dma.done [#allocation6], 2048
        $region52: #{tpu_custom_call.1} parent=39 // pred_fallthru
          _
        %s250 = sand.u32 %s31, 1
        %s251 = scalar_lea.sflag [#allocation3], %s250
        %s252 = sand.u32 %s31, 1
        %s253 = smul.addr %s252, 256
        %s254 = scalar_lea.vmem [#allocation2], %s253
        %p255 = pneg %p44
        %p256 = pneg %p41
        %p257 = pneg %p65
        %p258 = pneg %p62
        %p259 = pneg %p86
        %p260 = pneg %p83
        %p261 = pneg %p107
        %p262 = pneg %p104
        %p263 = pneg %p128
        %p264 = pneg %p125
        %p265 = pneg %p154
        %p266 = pneg %p151
        %s267 = sand.u32 %s141, 1
        %s268 = scalar_lea.sflag [#allocation4], %s267
        %s269 = sand.u32 %s141, 1
        %s270 = smul.addr %s269, 256
        %s271 = scalar_lea.vmem [#allocation8], %s270
        %s272 = smul.u32 32, %s23
        %s273 = smul.u32 32, %s23
        %v275 = vld [vmem:[%s237] sm:$0xff]
        %v276 = vld [vmem:[%s237 + $0x8] sm:$0xff]
        %v277 = vld [vmem:[%s237 + $0x10] sm:$0xff]
        %v278 = vld [vmem:[%s237 + $0x18] sm:$0xff]
        %v279 = vld [vmem:[%s237 + $0x20] sm:$0xff]
        %v280 = vld [vmem:[%s237 + $0x28] sm:$0xff]
        %v281 = vld [vmem:[%s237 + $0x30] sm:$0xff]
        %v282 = vld [vmem:[%s237 + $0x38] sm:$0xff]
        %v283 = vld [vmem:[%s237 + $0x40] sm:$0xff]
        %v284 = vld [vmem:[%s237 + $0x48] sm:$0xff]
        %v285 = vld [vmem:[%s237 + $0x50] sm:$0xff]
        %v286 = vld [vmem:[%s237 + $0x58] sm:$0xff]
        %v287 = vld [vmem:[%s237 + $0x60] sm:$0xff]
        %v288 = vld [vmem:[%s237 + $0x68] sm:$0xff]
        %v289 = vld [vmem:[%s237 + $0x70] sm:$0xff]
        %v290 = vld [vmem:[%s237 + $0x78] sm:$0xff]
        %v291 = vld [vmem:[%s237 + $0x80] sm:$0xff]
        %v292 = vld [vmem:[%s237 + $0x88] sm:$0xff]
        %v293 = vld [vmem:[%s237 + $0x90] sm:$0xff]
        %v294 = vld [vmem:[%s237 + $0x98] sm:$0xff]
        %v295 = vld [vmem:[%s237 + $0xa0] sm:$0xff]
        %v296 = vld [vmem:[%s237 + $0xa8] sm:$0xff]
        %v297 = vld [vmem:[%s237 + $0xb0] sm:$0xff]
        %v298 = vld [vmem:[%s237 + $0xb8] sm:$0xff]
        %v299 = vld [vmem:[%s237 + $0xc0] sm:$0xff]
        %v300 = vld [vmem:[%s237 + $0xc8] sm:$0xff]
        %v301 = vld [vmem:[%s237 + $0xd0] sm:$0xff]
        %v302 = vld [vmem:[%s237 + $0xd8] sm:$0xff]
        %v303 = vld [vmem:[%s237 + $0xe0] sm:$0xff]
        %v304 = vld [vmem:[%s237 + $0xe8] sm:$0xff]
        %v305 = vld [vmem:[%s237 + $0xf0] sm:$0xff]
        %v306 = vld [vmem:[%s237 + $0xf8] sm:$0xff]
        %v307 = vpack.c.bf16 %v276, %v275
        %v308 = vpack.c.bf16 %v278, %v277
        %v309 = vpack.c.bf16 %v280, %v279
        %v310 = vpack.c.bf16 %v282, %v281
        %v311 = vpack.c.bf16 %v284, %v283
        %v312 = vpack.c.bf16 %v286, %v285
        %v313 = vpack.c.bf16 %v288, %v287
        %v314 = vpack.c.bf16 %v290, %v289
        %v315 = vpack.c.bf16 %v292, %v291
        %v316 = vpack.c.bf16 %v294, %v293
        %v317 = vpack.c.bf16 %v296, %v295
        %v318 = vpack.c.bf16 %v298, %v297
        %v319 = vpack.c.bf16 %v300, %v299
        %v320 = vpack.c.bf16 %v302, %v301
        %v321 = vpack.c.bf16 %v304, %v303
        %v322 = vpack.c.bf16 %v306, %v305
        %v323 = vld [vmem:[#allocation5] sm:$0xff]
        %v324 = vld [vmem:[#allocation5 + $0x8] sm:$0xff]
        %v325 = vld [vmem:[#allocation5 + $0x10] sm:$0xff]
        %v326 = vld [vmem:[#allocation5 + $0x18] sm:$0xff]
        %v327 = vld [vmem:[#allocation5 + $0x20] sm:$0xff]
        %v328 = vld [vmem:[#allocation5 + $0x28] sm:$0xff]
        %v329 = vld [vmem:[#allocation5 + $0x30] sm:$0xff]
        %v330 = vld [vmem:[#allocation5 + $0x38] sm:$0xff]
        %v331 = vld [vmem:[#allocation5 + $0x40] sm:$0xff]
        %v332 = vld [vmem:[#allocation5 + $0x48] sm:$0xff]
        %v333 = vld [vmem:[#allocation5 + $0x50] sm:$0xff]
        %v334 = vld [vmem:[#allocation5 + $0x58] sm:$0xff]
        %v335 = vld [vmem:[#allocation5 + $0x60] sm:$0xff]
        %v336 = vld [vmem:[#allocation5 + $0x68] sm:$0xff]
        %v337 = vld [vmem:[#allocation5 + $0x70] sm:$0xff]
        %v338 = vld [vmem:[#allocation5 + $0x78] sm:$0xff]
        %v339 = vld [vmem:[%s2] sm:$0x3]
        %v341 = vlaneseq
        %v342 = vshrl.u32 %v341, 7
        %v343 = vsub.s32 0, %v342
        %v344 = vrot.slane %v339, %v343
        %v345 = vlaneseq
        %v346 = vshrl.u32 %v345, 7
        %v347 = vsub.s32 1, %v346
        %v348 = vrot.slane %v339, %v347
        %v367 = vunpack.c.l.b16 %v323
        %v368 = vunpack.c.h.b16 %v323
        %v369 = vunpack.c.l.b16 %v324
        %v370 = vunpack.c.h.b16 %v324
        %v371 = vunpack.c.l.b16 %v325
        %v372 = vunpack.c.h.b16 %v325
        %v373 = vunpack.c.l.b16 %v326
        %v374 = vunpack.c.h.b16 %v326
        %v375 = vunpack.c.l.b16 %v327
        %v376 = vunpack.c.h.b16 %v327
        %v377 = vunpack.c.l.b16 %v328
        %v378 = vunpack.c.h.b16 %v328
        %v379 = vunpack.c.l.b16 %v329
        %v380 = vunpack.c.h.b16 %v329
        %v381 = vunpack.c.l.b16 %v330
        %v382 = vunpack.c.h.b16 %v330
        %v383 = vunpack.c.l.b16 %v331
        %v384 = vunpack.c.h.b16 %v331
        %v385 = vunpack.c.l.b16 %v332
        %v386 = vunpack.c.h.b16 %v332
        %v387 = vunpack.c.l.b16 %v333
        %v388 = vunpack.c.h.b16 %v333
        %v389 = vunpack.c.l.b16 %v334
        %v390 = vunpack.c.h.b16 %v334
        %v391 = vunpack.c.l.b16 %v335
        %v392 = vunpack.c.h.b16 %v335
        %v393 = vunpack.c.l.b16 %v336
        %v394 = vunpack.c.h.b16 %v336
        %v395 = vunpack.c.l.b16 %v337
        %v396 = vunpack.c.h.b16 %v337
        %v397 = vunpack.c.l.b16 %v338
        %v398 = vunpack.c.h.b16 %v338
        %v399 = vpack.c.b16 %v369, %v367
        %v400 = vpack.c.b16 %v370, %v368
        %v401 = vpack.c.b16 %v373, %v371
        %v402 = vpack.c.b16 %v374, %v372
        %v403 = vpack.c.b16 %v377, %v375
        %v404 = vpack.c.b16 %v378, %v376
        %v405 = vpack.c.b16 %v381, %v379
        %v406 = vpack.c.b16 %v382, %v380
        %v407 = vpack.c.b16 %v385, %v383
        %v408 = vpack.c.b16 %v386, %v384
        %v409 = vpack.c.b16 %v389, %v387
        %v410 = vpack.c.b16 %v390, %v388
        %v411 = vpack.c.b16 %v393, %v391
        %v412 = vpack.c.b16 %v394, %v392
        %v413 = vpack.c.b16 %v397, %v395
        %v414 = vpack.c.b16 %v398, %v396
        %431 = vmatprep.subr.bf16.mxu0 %v400
        %432 = vmatpush1.bf16.msra.mxu0 %v399
        %433 = vmatprep.subr.bf16.mxu0 %v402
        %434 = vmatpush1.bf16.msra.mxu0 %v401
        %435 = vmatprep.subr.bf16.mxu0 %v404
        %436 = vmatpush1.bf16.msra.mxu0 %v403
        %437 = vmatprep.subr.bf16.mxu0 %v406
        %438 = vmatpush1.bf16.msra.mxu0 %v405
        %439 = vmatprep.subr.bf16.mxu0 %v408
        %440 = vmatpush1.bf16.msra.mxu0 %v407
        %441 = vmatprep.subr.bf16.mxu0 %v410
        %442 = vmatpush1.bf16.msra.mxu0 %v409
        %443 = vmatprep.subr.bf16.mxu0 %v412
        %444 = vmatpush1.bf16.msra.mxu0 %v411
        %445 = vmatprep.subr.bf16.mxu0 %v414
        %446 = vmatpush1.bf16.msra.mxu0 %v413
        %447 = vmatprep.subr.bf16.mxu0 0
        %448 = vmatpush1.bf16.msra.mxu0 0
        %449 = vmatprep.subr.bf16.mxu0 0
        %450 = vmatpush1.bf16.msra.mxu0 0
        %451 = vmatprep.subr.bf16.mxu0 0
        %452 = vmatpush1.bf16.msra.mxu0 0
        %453 = vmatprep.subr.bf16.mxu0 0
        %454 = vmatpush1.bf16.msra.mxu0 0
        %455 = vmatprep.subr.bf16.mxu0 0
        %456 = vmatpush1.bf16.msra.mxu0 0
        %457 = vmatprep.subr.bf16.mxu0 0
        %458 = vmatpush1.bf16.msra.mxu0 0
        %459 = vmatprep.subr.bf16.mxu0 0
        %460 = vmatpush1.bf16.msra.mxu0 0
        %461 = vmatprep.subr.bf16.mxu0 0
        %462 = vmatpush1.bf16.msra.mxu0 0
        %463 = vmatprep.mubr.bf16.mxu0 0
        %464 = vmatmul.mubr.bf16.gmra.mrb[0].mxu0 %v307
        %v465 = vpop.f32.mrb[0].mxu0
        %v466 = vadd.f32 %v344, %v465
        %v467 = vpop.f32.mrb[0].mxu0
        %v468 = vadd.f32 %v348, %v467
        %v469 = vpop.f32.mrb[0].mxu0
        %v470 = vadd.f32 %v344, %v469
        %v471 = vpop.f32.mrb[0].mxu0
        %v472 = vadd.f32 %v348, %v471
        %473 = vmatprep.mubr.bf16.mxu0 0
        %474 = vmatmul.mubr.bf16.gmra.mrb[0].mxu0 %v308
        %v475 = vpop.f32.mrb[0].mxu0
        %v476 = vadd.f32 %v344, %v475
        %v477 = vpop.f32.mrb[0].mxu0
        %v478 = vadd.f32 %v348, %v477
        %v479 = vpop.f32.mrb[0].mxu0
        %v480 = vadd.f32 %v344, %v479
        %v481 = vpop.f32.mrb[0].mxu0
        %v482 = vadd.f32 %v348, %v481
        %483 = vmatprep.mubr.bf16.mxu0 0
        %484 = vmatmul.mubr.bf16.gmra.mrb[0].mxu0 %v309
        %v485 = vpop.f32.mrb[0].mxu0
        %v486 = vadd.f32 %v344, %v485
        %v487 = vpop.f32.mrb[0].mxu0
        %v488 = vadd.f32 %v348, %v487
        %v489 = vpop.f32.mrb[0].mxu0
        %v490 = vadd.f32 %v344, %v489
        %v491 = vpop.f32.mrb[0].mxu0
        %v492 = vadd.f32 %v348, %v491
        %493 = vmatprep.mubr.bf16.mxu0 0
        %494 = vmatmul.mubr.bf16.gmra.mrb[0].mxu0 %v310
        %v495 = vpop.f32.mrb[0].mxu0
        %v496 = vadd.f32 %v344, %v495
        %v497 = vpop.f32.mrb[0].mxu0
        %v498 = vadd.f32 %v348, %v497
        %v499 = vpop.f32.mrb[0].mxu0
        %v500 = vadd.f32 %v344, %v499
        %v501 = vpop.f32.mrb[0].mxu0
        %v502 = vadd.f32 %v348, %v501
        %503 = vmatprep.mubr.bf16.mxu0 0
        %504 = vmatmul.mubr.bf16.gmra.mrb[0].mxu0 %v311
        %v505 = vpop.f32.mrb[0].mxu0
        %v506 = vadd.f32 %v344, %v505
        %v507 = vpop.f32.mrb[0].mxu0
        %v508 = vadd.f32 %v348, %v507
        %v509 = vpop.f32.mrb[0].mxu0
        %v510 = vadd.f32 %v344, %v509
        %v511 = vpop.f32.mrb[0].mxu0
        %v512 = vadd.f32 %v348, %v511
        %513 = vmatprep.mubr.bf16.mxu0 0
        %514 = vmatmul.mubr.bf16.gmra.mrb[0].mxu0 %v312
        %v515 = vpop.f32.mrb[0].mxu0
        %v516 = vadd.f32 %v344, %v515
        %v517 = vpop.f32.mrb[0].mxu0
        %v518 = vadd.f32 %v348, %v517
        %v519 = vpop.f32.mrb[0].mxu0
        %v520 = vadd.f32 %v344, %v519
        %v521 = vpop.f32.mrb[0].mxu0
        %v522 = vadd.f32 %v348, %v521
        %523 = vmatprep.mubr.bf16.mxu0 0
        %524 = vmatmul.mubr.bf16.gmra.mrb[0].mxu0 %v313
        %v525 = vpop.f32.mrb[0].mxu0
        %v526 = vadd.f32 %v344, %v525
        %v527 = vpop.f32.mrb[0].mxu0
        %v528 = vadd.f32 %v348, %v527
        %v529 = vpop.f32.mrb[0].mxu0
        %v530 = vadd.f32 %v344, %v529
        %v531 = vpop.f32.mrb[0].mxu0
        %v532 = vadd.f32 %v348, %v531
        %533 = vmatprep.mubr.bf16.mxu0 0
        %534 = vmatmul.mubr.bf16.gmra.mrb[0].mxu0 %v314
        %v535 = vpop.f32.mrb[0].mxu0
        %v536 = vadd.f32 %v344, %v535
        %v537 = vpop.f32.mrb[0].mxu0
        %v538 = vadd.f32 %v348, %v537
        %v539 = vpop.f32.mrb[0].mxu0
        %v540 = vadd.f32 %v344, %v539
        %v541 = vpop.f32.mrb[0].mxu0
        %v542 = vadd.f32 %v348, %v541
        %543 = vmatprep.mubr.bf16.mxu0 0
        %544 = vmatmul.mubr.bf16.gmra.mrb[0].mxu0 %v315
        %v545 = vpop.f32.mrb[0].mxu0
        %v546 = vadd.f32 %v344, %v545
        %v547 = vpop.f32.mrb[0].mxu0
        %v548 = vadd.f32 %v348, %v547
        %v549 = vpop.f32.mrb[0].mxu0
        %v550 = vadd.f32 %v344, %v549
        %v551 = vpop.f32.mrb[0].mxu0
        %v552 = vadd.f32 %v348, %v551
        %553 = vmatprep.mubr.bf16.mxu0 0
        %554 = vmatmul.mubr.bf16.gmra.mrb[0].mxu0 %v316
        %v555 = vpop.f32.mrb[0].mxu0
        %v556 = vadd.f32 %v344, %v555
        %v557 = vpop.f32.mrb[0].mxu0
        %v558 = vadd.f32 %v348, %v557
        %v559 = vpop.f32.mrb[0].mxu0
        %v560 = vadd.f32 %v344, %v559
        %v561 = vpop.f32.mrb[0].mxu0
        %v562 = vadd.f32 %v348, %v561
        %563 = vmatprep.mubr.bf16.mxu0 0
        %564 = vmatmul.mubr.bf16.gmra.mrb[0].mxu0 %v317
        %v565 = vpop.f32.mrb[0].mxu0
        %v566 = vadd.f32 %v344, %v565
        %v567 = vpop.f32.mrb[0].mxu0
        %v568 = vadd.f32 %v348, %v567
        %v569 = vpop.f32.mrb[0].mxu0
        %v570 = vadd.f32 %v344, %v569
        %v571 = vpop.f32.mrb[0].mxu0
        %v572 = vadd.f32 %v348, %v571
        %573 = vmatprep.mubr.bf16.mxu0 0
        %574 = vmatmul.mubr.bf16.gmra.mrb[0].mxu0 %v318
        %v575 = vpop.f32.mrb[0].mxu0
        %v576 = vadd.f32 %v344, %v575
        %v577 = vpop.f32.mrb[0].mxu0
        %v578 = vadd.f32 %v348, %v577
        %v579 = vpop.f32.mrb[0].mxu0
        %v580 = vadd.f32 %v344, %v579
        %v581 = vpop.f32.mrb[0].mxu0
        %v582 = vadd.f32 %v348, %v581
        %583 = vmatprep.mubr.bf16.mxu0 0
        %584 = vmatmul.mubr.bf16.gmra.mrb[0].mxu0 %v319
        %v585 = vpop.f32.mrb[0].mxu0
        %v586 = vadd.f32 %v344, %v585
        %v587 = vpop.f32.mrb[0].mxu0
        %v588 = vadd.f32 %v348, %v587
        %v589 = vpop.f32.mrb[0].mxu0
        %v590 = vadd.f32 %v344, %v589
        %v591 = vpop.f32.mrb[0].mxu0
        %v592 = vadd.f32 %v348, %v591
        %593 = vmatprep.mubr.bf16.mxu0 0
        %594 = vmatmul.mubr.bf16.gmra.mrb[0].mxu0 %v320
        %v595 = vpop.f32.mrb[0].mxu0
        %v596 = vadd.f32 %v344, %v595
        %v597 = vpop.f32.mrb[0].mxu0
        %v598 = vadd.f32 %v348, %v597
        %v599 = vpop.f32.mrb[0].mxu0
        %v600 = vadd.f32 %v344, %v599
        %v601 = vpop.f32.mrb[0].mxu0
        %v602 = vadd.f32 %v348, %v601
        %603 = vmatprep.mubr.bf16.mxu0 0
        %604 = vmatmul.mubr.bf16.gmra.mrb[0].mxu0 %v321
        %v605 = vpop.f32.mrb[0].mxu0
        %v606 = vadd.f32 %v344, %v605
        %v607 = vpop.f32.mrb[0].mxu0
        %v608 = vadd.f32 %v348, %v607
        %v609 = vpop.f32.mrb[0].mxu0
        %v610 = vadd.f32 %v344, %v609
        %v611 = vpop.f32.mrb[0].mxu0
        %v612 = vadd.f32 %v348, %v611
        %613 = vmatprep.mubr.bf16.mxu0 0
        %614 = vmatmul.mubr.bf16.gmra.mrb[0].mxu0 %v322
        %v615 = vpop.f32.mrb[0].mxu0
        %v616 = vadd.f32 %v344, %v615
        %v617 = vpop.f32.mrb[0].mxu0
        %v618 = vadd.f32 %v348, %v617
        %v619 = vpop.f32.mrb[0].mxu0
        %v620 = vadd.f32 %v344, %v619
        %v621 = vpop.f32.mrb[0].mxu0
        %v622 = vadd.f32 %v348, %v621
        %623 = vdwg.mxu0
        %v624 = vmax.f32 %v466, 0.0
        %v625 = vmax.f32 %v468, 0.0
        %v626 = vmax.f32 %v470, 0.0
        %v627 = vmax.f32 %v472, 0.0
        %v628 = vmax.f32 %v476, 0.0
        %v629 = vmax.f32 %v478, 0.0
        %v630 = vmax.f32 %v480, 0.0
        %v631 = vmax.f32 %v482, 0.0
        %v632 = vmax.f32 %v486, 0.0
        %v633 = vmax.f32 %v488, 0.0
        %v634 = vmax.f32 %v490, 0.0
        %v635 = vmax.f32 %v492, 0.0
        %v636 = vmax.f32 %v496, 0.0
        %v637 = vmax.f32 %v498, 0.0
        %v638 = vmax.f32 %v500, 0.0
        %v639 = vmax.f32 %v502, 0.0
        %v640 = vmax.f32 %v506, 0.0
        %v641 = vmax.f32 %v508, 0.0
        %v642 = vmax.f32 %v510, 0.0
        %v643 = vmax.f32 %v512, 0.0
        %v644 = vmax.f32 %v516, 0.0
        %v645 = vmax.f32 %v518, 0.0
        %v646 = vmax.f32 %v520, 0.0
        %v647 = vmax.f32 %v522, 0.0
        %v648 = vmax.f32 %v526, 0.0
        %v649 = vmax.f32 %v528, 0.0
        %v650 = vmax.f32 %v530, 0.0
        %v651 = vmax.f32 %v532, 0.0
        %v652 = vmax.f32 %v536, 0.0
        %v653 = vmax.f32 %v538, 0.0
        %v654 = vmax.f32 %v540, 0.0
        %v655 = vmax.f32 %v542, 0.0
        %v656 = vmax.f32 %v546, 0.0
        %v657 = vmax.f32 %v548, 0.0
        %v658 = vmax.f32 %v550, 0.0
        %v659 = vmax.f32 %v552, 0.0
        %v660 = vmax.f32 %v556, 0.0
        %v661 = vmax.f32 %v558, 0.0
        %v662 = vmax.f32 %v560, 0.0
        %v663 = vmax.f32 %v562, 0.0
        %v664 = vmax.f32 %v566, 0.0
        %v665 = vmax.f32 %v568, 0.0
        %v666 = vmax.f32 %v570, 0.0
        %v667 = vmax.f32 %v572, 0.0
        %v668 = vmax.f32 %v576, 0.0
        %v669 = vmax.f32 %v578, 0.0
        %v670 = vmax.f32 %v580, 0.0
        %v671 = vmax.f32 %v582, 0.0
        %v672 = vmax.f32 %v586, 0.0
        %v673 = vmax.f32 %v588, 0.0
        %v674 = vmax.f32 %v590, 0.0
        %v675 = vmax.f32 %v592, 0.0
        %v676 = vmax.f32 %v596, 0.0
        %v677 = vmax.f32 %v598, 0.0
        %v678 = vmax.f32 %v600, 0.0
        %v679 = vmax.f32 %v602, 0.0
        %v680 = vmax.f32 %v606, 0.0
        %v681 = vmax.f32 %v608, 0.0
        %v682 = vmax.f32 %v610, 0.0
        %v683 = vmax.f32 %v612, 0.0
        %v684 = vmax.f32 %v616, 0.0
        %v685 = vmax.f32 %v618, 0.0
        %v686 = vmax.f32 %v620, 0.0
        %v687 = vmax.f32 %v622, 0.0
        %v688 = vpack.c.bf16 %v626, %v624
        %v689 = vpack.c.bf16 %v627, %v625
        %v690 = vpack.c.bf16 %v630, %v628
        %v691 = vpack.c.bf16 %v631, %v629
        %v692 = vpack.c.bf16 %v634, %v632
        %v693 = vpack.c.bf16 %v635, %v633
        %v694 = vpack.c.bf16 %v638, %v636
        %v695 = vpack.c.bf16 %v639, %v637
        %v696 = vpack.c.bf16 %v642, %v640
        %v697 = vpack.c.bf16 %v643, %v641
        %v698 = vpack.c.bf16 %v646, %v644
        %v699 = vpack.c.bf16 %v647, %v645
        %v700 = vpack.c.bf16 %v650, %v648
        %v701 = vpack.c.bf16 %v651, %v649
        %v702 = vpack.c.bf16 %v654, %v652
        %v703 = vpack.c.bf16 %v655, %v653
        %v704 = vpack.c.bf16 %v658, %v656
        %v705 = vpack.c.bf16 %v659, %v657
        %v706 = vpack.c.bf16 %v662, %v660
        %v707 = vpack.c.bf16 %v663, %v661
        %v708 = vpack.c.bf16 %v666, %v664
        %v709 = vpack.c.bf16 %v667, %v665
        %v710 = vpack.c.bf16 %v670, %v668
        %v711 = vpack.c.bf16 %v671, %v669
        %v712 = vpack.c.bf16 %v674, %v672
        %v713 = vpack.c.bf16 %v675, %v673
        %v714 = vpack.c.bf16 %v678, %v676
        %v715 = vpack.c.bf16 %v679, %v677
        %v716 = vpack.c.bf16 %v682, %v680
        %v717 = vpack.c.bf16 %v683, %v681
        %v718 = vpack.c.bf16 %v686, %v684
        %v719 = vpack.c.bf16 %v687, %v685
        %v720 = vld [vmem:[#allocation7] sm:$0xf]
        %v721 = vld [vmem:[#allocation7 + $0x4] sm:$0xf]
        %v722 = vld [vmem:[#allocation7 + $0x8] sm:$0xf]
        %v723 = vld [vmem:[#allocation7 + $0xc] sm:$0xf]
        %v724 = vld [vmem:[#allocation7 + $0x10] sm:$0xf]
        %v725 = vld [vmem:[#allocation7 + $0x14] sm:$0xf]
        %v726 = vld [vmem:[#allocation7 + $0x18] sm:$0xf]
        %v727 = vld [vmem:[#allocation7 + $0x1c] sm:$0xf]
        %v728 = vld [vmem:[#allocation7 + $0x20] sm:$0xf]
        %v729 = vld [vmem:[#allocation7 + $0x24] sm:$0xf]
        %v730 = vld [vmem:[#allocation7 + $0x28] sm:$0xf]
        %v731 = vld [vmem:[#allocation7 + $0x2c] sm:$0xf]
        %v732 = vld [vmem:[#allocation7 + $0x30] sm:$0xf]
        %v733 = vld [vmem:[#allocation7 + $0x34] sm:$0xf]
        %v734 = vld [vmem:[#allocation7 + $0x38] sm:$0xf]
        %v735 = vld [vmem:[#allocation7 + $0x3c] sm:$0xf]
        %v736 = vld [vmem:[#allocation7 + $0x40] sm:$0xf]
        %v737 = vld [vmem:[#allocation7 + $0x44] sm:$0xf]
        %v738 = vld [vmem:[#allocation7 + $0x48] sm:$0xf]
        %v739 = vld [vmem:[#allocation7 + $0x4c] sm:$0xf]
        %v740 = vld [vmem:[#allocation7 + $0x50] sm:$0xf]
        %v741 = vld [vmem:[#allocation7 + $0x54] sm:$0xf]
        %v742 = vld [vmem:[#allocation7 + $0x58] sm:$0xf]
        %v743 = vld [vmem:[#allocation7 + $0x5c] sm:$0xf]
        %v744 = vld [vmem:[#allocation7 + $0x60] sm:$0xf]
        %v745 = vld [vmem:[#allocation7 + $0x64] sm:$0xf]
        %v746 = vld [vmem:[#allocation7 + $0x68] sm:$0xf]
        %v747 = vld [vmem:[#allocation7 + $0x6c] sm:$0xf]
        %v748 = vld [vmem:[#allocation7 + $0x70] sm:$0xf]
        %v749 = vld [vmem:[#allocation7 + $0x74] sm:$0xf]
        %v750 = vld [vmem:[#allocation7 + $0x78] sm:$0xf]
        %v751 = vld [vmem:[#allocation7 + $0x7c] sm:$0xf]
        %v752 = vld [vmem:[%s4] sm:$0x1]
        %v754 = vlaneseq
        %v755 = vshrl.u32 %v754, 7
        %v756 = vsub.s32 0, %v755
        %v757 = vrot.slane %v752, %v756
        %v791 = vunpack.c.l.b16 %v720
        %v792 = vunpack.c.l.b16 %v721
        %v793 = vunpack.c.l.b16 %v722
        %v794 = vunpack.c.l.b16 %v723
        %v795 = vunpack.c.l.b16 %v724
        %v796 = vunpack.c.l.b16 %v725
        %v797 = vunpack.c.l.b16 %v726
        %v798 = vunpack.c.l.b16 %v727
        %v799 = vunpack.c.l.b16 %v728
        %v800 = vunpack.c.l.b16 %v729
        %v801 = vunpack.c.l.b16 %v730
        %v802 = vunpack.c.l.b16 %v731
        %v803 = vunpack.c.l.b16 %v732
        %v804 = vunpack.c.l.b16 %v733
        %v805 = vunpack.c.l.b16 %v734
        %v806 = vunpack.c.l.b16 %v735
        %v807 = vunpack.c.l.b16 %v736
        %v808 = vunpack.c.l.b16 %v737
        %v809 = vunpack.c.l.b16 %v738
        %v810 = vunpack.c.l.b16 %v739
        %v811 = vunpack.c.l.b16 %v740
        %v812 = vunpack.c.l.b16 %v741
        %v813 = vunpack.c.l.b16 %v742
        %v814 = vunpack.c.l.b16 %v743
        %v815 = vunpack.c.l.b16 %v744
        %v816 = vunpack.c.l.b16 %v745
        %v817 = vunpack.c.l.b16 %v746
        %v818 = vunpack.c.l.b16 %v747
        %v819 = vunpack.c.l.b16 %v748
        %v820 = vunpack.c.l.b16 %v749
        %v821 = vunpack.c.l.b16 %v750
        %v822 = vunpack.c.l.b16 %v751
        %v823 = vpack.c.b16 %v792, %v791
        %v824 = vpack.c.b16 %v794, %v793
        %v825 = vpack.c.b16 %v796, %v795
        %v826 = vpack.c.b16 %v798, %v797
        %v827 = vpack.c.b16 %v800, %v799
        %v828 = vpack.c.b16 %v802, %v801
        %v829 = vpack.c.b16 %v804, %v803
        %v830 = vpack.c.b16 %v806, %v805
        %v831 = vpack.c.b16 %v808, %v807
        %v832 = vpack.c.b16 %v810, %v809
        %v833 = vpack.c.b16 %v812, %v811
        %v834 = vpack.c.b16 %v814, %v813
        %v835 = vpack.c.b16 %v816, %v815
        %v836 = vpack.c.b16 %v818, %v817
        %v837 = vpack.c.b16 %v820, %v819
        %v838 = vpack.c.b16 %v822, %v821
        %855 = vmatprep.subr.bf16.mxu0 0
        %856 = vmatpush1.bf16.msra.mxu0 %v823
        %857 = vmatprep.subr.bf16.mxu0 0
        %858 = vmatpush1.bf16.msra.mxu0 %v824
        %859 = vmatprep.subr.bf16.mxu0 0
        %860 = vmatpush1.bf16.msra.mxu0 %v825
        %861 = vmatprep.subr.bf16.mxu0 0
        %862 = vmatpush1.bf16.msra.mxu0 %v826
        %863 = vmatprep.subr.bf16.mxu0 0
        %864 = vmatpush1.bf16.msra.mxu0 %v827
        %865 = vmatprep.subr.bf16.mxu0 0
        %866 = vmatpush1.bf16.msra.mxu0 %v828
        %867 = vmatprep.subr.bf16.mxu0 0
        %868 = vmatpush1.bf16.msra.mxu0 %v829
        %869 = vmatprep.subr.bf16.mxu0 0
        %870 = vmatpush1.bf16.msra.mxu0 %v830
        %871 = vmatprep.subr.bf16.mxu0 0
        %872 = vmatpush1.bf16.msra.mxu0 %v831
        %873 = vmatprep.subr.bf16.mxu0 0
        %874 = vmatpush1.bf16.msra.mxu0 %v832
        %875 = vmatprep.subr.bf16.mxu0 0
        %876 = vmatpush1.bf16.msra.mxu0 %v833
        %877 = vmatprep.subr.bf16.mxu0 0
        %878 = vmatpush1.bf16.msra.mxu0 %v834
        %879 = vmatprep.subr.bf16.mxu0 0
        %880 = vmatpush1.bf16.msra.mxu0 %v835
        %881 = vmatprep.subr.bf16.mxu0 0
        %882 = vmatpush1.bf16.msra.mxu0 %v836
        %883 = vmatprep.subr.bf16.mxu0 0
        %884 = vmatpush1.bf16.msra.mxu0 %v837
        %885 = vmatprep.subr.bf16.mxu0 0
        %886 = vmatpush1.bf16.msra.mxu0 %v838
        %887 = vmatprep.mubr.bf16.mxu0 %v689
        %888 = vmatmul.mubr.bf16.gmra.mrb[0].mxu0 %v688
        %v889 = vpop.f32.mrb[0].mxu0
        %v890 = vadd.f32 %v757, %v889
        %v891 = vpop.f32.mrb[0].mxu0
        %v892 = vpop.f32.mrb[0].mxu0
        %v893 = vadd.f32 %v757, %v892
        %v894 = vpop.f32.mrb[0].mxu0
        %895 = vmatprep.mubr.bf16.mxu0 %v691
        %896 = vmatmul.mubr.bf16.gmra.mrb[0].mxu0 %v690
        %v897 = vpop.f32.mrb[0].mxu0
        %v898 = vadd.f32 %v757, %v897
        %v899 = vpop.f32.mrb[0].mxu0
        %v900 = vpop.f32.mrb[0].mxu0
        %v901 = vadd.f32 %v757, %v900
        %v902 = vpop.f32.mrb[0].mxu0
        %903 = vmatprep.mubr.bf16.mxu0 %v693
        %904 = vmatmul.mubr.bf16.gmra.mrb[0].mxu0 %v692
        %v905 = vpop.f32.mrb[0].mxu0
        %v906 = vadd.f32 %v757, %v905
        %v907 = vpop.f32.mrb[0].mxu0
        %v908 = vpop.f32.mrb[0].mxu0
        %v909 = vadd.f32 %v757, %v908
        %v910 = vpop.f32.mrb[0].mxu0
        %911 = vmatprep.mubr.bf16.mxu0 %v695
        %912 = vmatmul.mubr.bf16.gmra.mrb[0].mxu0 %v694
        %v913 = vpop.f32.mrb[0].mxu0
        %v914 = vadd.f32 %v757, %v913
        %v915 = vpop.f32.mrb[0].mxu0
        %v916 = vpop.f32.mrb[0].mxu0
        %v917 = vadd.f32 %v757, %v916
        %v918 = vpop.f32.mrb[0].mxu0
        %919 = vmatprep.mubr.bf16.mxu0 %v697
        %920 = vmatmul.mubr.bf16.gmra.mrb[0].mxu0 %v696
        %v921 = vpop.f32.mrb[0].mxu0
        %v922 = vadd.f32 %v757, %v921
        %v923 = vpop.f32.mrb[0].mxu0
        %v924 = vpop.f32.mrb[0].mxu0
        %v925 = vadd.f32 %v757, %v924
        %v926 = vpop.f32.mrb[0].mxu0
        %927 = vmatprep.mubr.bf16.mxu0 %v699
        %928 = vmatmul.mubr.bf16.gmra.mrb[0].mxu0 %v698
        %v929 = vpop.f32.mrb[0].mxu0
        %v930 = vadd.f32 %v757, %v929
        %v931 = vpop.f32.mrb[0].mxu0
        %v932 = vpop.f32.mrb[0].mxu0
        %v933 = vadd.f32 %v757, %v932
        %v934 = vpop.f32.mrb[0].mxu0
        %935 = vmatprep.mubr.bf16.mxu0 %v701
        %936 = vmatmul.mubr.bf16.gmra.mrb[0].mxu0 %v700
        %v937 = vpop.f32.mrb[0].mxu0
        %v938 = vadd.f32 %v757, %v937
        %v939 = vpop.f32.mrb[0].mxu0
        %v940 = vpop.f32.mrb[0].mxu0
        %v941 = vadd.f32 %v757, %v940
        %v942 = vpop.f32.mrb[0].mxu0
        %943 = vmatprep.mubr.bf16.mxu0 %v703
        %944 = vmatmul.mubr.bf16.gmra.mrb[0].mxu0 %v702
        %v945 = vpop.f32.mrb[0].mxu0
        %v946 = vadd.f32 %v757, %v945
        %v947 = vpop.f32.mrb[0].mxu0
        %v948 = vpop.f32.mrb[0].mxu0
        %v949 = vadd.f32 %v757, %v948
        %v950 = vpop.f32.mrb[0].mxu0
        %951 = vmatprep.mubr.bf16.mxu0 %v705
        %952 = vmatmul.mubr.bf16.gmra.mrb[0].mxu0 %v704
        %v953 = vpop.f32.mrb[0].mxu0
        %v954 = vadd.f32 %v757, %v953
        %v955 = vpop.f32.mrb[0].mxu0
        %v956 = vpop.f32.mrb[0].mxu0
        %v957 = vadd.f32 %v757, %v956
        %v958 = vpop.f32.mrb[0].mxu0
        %959 = vmatprep.mubr.bf16.mxu0 %v707
        %960 = vmatmul.mubr.bf16.gmra.mrb[0].mxu0 %v706
        %v961 = vpop.f32.mrb[0].mxu0
        %v962 = vadd.f32 %v757, %v961
        %v963 = vpop.f32.mrb[0].mxu0
        %v964 = vpop.f32.mrb[0].mxu0
        %v965 = vadd.f32 %v757, %v964
        %v966 = vpop.f32.mrb[0].mxu0
        %967 = vmatprep.mubr.bf16.mxu0 %v709
        %968 = vmatmul.mubr.bf16.gmra.mrb[0].mxu0 %v708
        %v969 = vpop.f32.mrb[0].mxu0
        %v970 = vadd.f32 %v757, %v969
        %v971 = vpop.f32.mrb[0].mxu0
        %v972 = vpop.f32.mrb[0].mxu0
        %v973 = vadd.f32 %v757, %v972
        %v974 = vpop.f32.mrb[0].mxu0
        %975 = vmatprep.mubr.bf16.mxu0 %v711
        %976 = vmatmul.mubr.bf16.gmra.mrb[0].mxu0 %v710
        %v977 = vpop.f32.mrb[0].mxu0
        %v978 = vadd.f32 %v757, %v977
        %v979 = vpop.f32.mrb[0].mxu0
        %v980 = vpop.f32.mrb[0].mxu0
        %v981 = vadd.f32 %v757, %v980
        %v982 = vpop.f32.mrb[0].mxu0
        %983 = vmatprep.mubr.bf16.mxu0 %v713
        %984 = vmatmul.mubr.bf16.gmra.mrb[0].mxu0 %v712
        %v985 = vpop.f32.mrb[0].mxu0
        %v986 = vadd.f32 %v757, %v985
        %v987 = vpop.f32.mrb[0].mxu0
        %v988 = vpop.f32.mrb[0].mxu0
        %v989 = vadd.f32 %v757, %v988
        %v990 = vpop.f32.mrb[0].mxu0
        %991 = vmatprep.mubr.bf16.mxu0 %v715
        %992 = vmatmul.mubr.bf16.gmra.mrb[0].mxu0 %v714
        %v993 = vpop.f32.mrb[0].mxu0
        %v994 = vadd.f32 %v757, %v993
        %v995 = vpop.f32.mrb[0].mxu0
        %v996 = vpop.f32.mrb[0].mxu0
        %v997 = vadd.f32 %v757, %v996
        %v998 = vpop.f32.mrb[0].mxu0
        %999 = vmatprep.mubr.bf16.mxu0 %v717
        %1000 = vmatmul.mubr.bf16.gmra.mrb[0].mxu0 %v716
        %v1001 = vpop.f32.mrb[0].mxu0
        %v1002 = vadd.f32 %v757, %v1001
        %v1003 = vpop.f32.mrb[0].mxu0
        %v1004 = vpop.f32.mrb[0].mxu0
        %v1005 = vadd.f32 %v757, %v1004
        %v1006 = vpop.f32.mrb[0].mxu0
        %1007 = vmatprep.mubr.bf16.mxu0 %v719
        %1008 = vmatmul.mubr.bf16.gmra.mrb[0].mxu0 %v718
        %v1009 = vpop.f32.mrb[0].mxu0
        %v1010 = vadd.f32 %v757, %v1009
        %v1011 = vpop.f32.mrb[0].mxu0
        %v1012 = vpop.f32.mrb[0].mxu0
        %v1013 = vadd.f32 %v757, %v1012
        %v1014 = vpop.f32.mrb[0].mxu0
        %1015 = vdwg.mxu0
        %1016 = vst [vmem:[%s271] sm:$0xff] %v890
        %1017 = vst [vmem:[%s271 + $0x8] sm:$0xff] %v893
        %1018 = vst [vmem:[%s271 + $0x10] sm:$0xff] %v898
        %1019 = vst [vmem:[%s271 + $0x18] sm:$0xff] %v901
        %1020 = vst [vmem:[%s271 + $0x20] sm:$0xff] %v906
        %1021 = vst [vmem:[%s271 + $0x28] sm:$0xff] %v909
        %1022 = vst [vmem:[%s271 + $0x30] sm:$0xff] %v914
        %1023 = vst [vmem:[%s271 + $0x38] sm:$0xff] %v917
        %1024 = vst [vmem:[%s271 + $0x40] sm:$0xff] %v922
        %1025 = vst [vmem:[%s271 + $0x48] sm:$0xff] %v925
        %1026 = vst [vmem:[%s271 + $0x50] sm:$0xff] %v930
        %1027 = vst [vmem:[%s271 + $0x58] sm:$0xff] %v933
        %1028 = vst [vmem:[%s271 + $0x60] sm:$0xff] %v938
        %1029 = vst [vmem:[%s271 + $0x68] sm:$0xff] %v941
        %1030 = vst [vmem:[%s271 + $0x70] sm:$0xff] %v946
        %1031 = vst [vmem:[%s271 + $0x78] sm:$0xff] %v949
        %1032 = vst [vmem:[%s271 + $0x80] sm:$0xff] %v954
        %1033 = vst [vmem:[%s271 + $0x88] sm:$0xff] %v957
        %1034 = vst [vmem:[%s271 + $0x90] sm:$0xff] %v962
        %1035 = vst [vmem:[%s271 + $0x98] sm:$0xff] %v965
        %1036 = vst [vmem:[%s271 + $0xa0] sm:$0xff] %v970
        %1037 = vst [vmem:[%s271 + $0xa8] sm:$0xff] %v973
        %1038 = vst [vmem:[%s271 + $0xb0] sm:$0xff] %v978
        %1039 = vst [vmem:[%s271 + $0xb8] sm:$0xff] %v981
        %1040 = vst [vmem:[%s271 + $0xc0] sm:$0xff] %v986
        %1041 = vst [vmem:[%s271 + $0xc8] sm:$0xff] %v989
        %1042 = vst [vmem:[%s271 + $0xd0] sm:$0xff] %v994
        %1043 = vst [vmem:[%s271 + $0xd8] sm:$0xff] %v997
        %1044 = vst [vmem:[%s271 + $0xe0] sm:$0xff] %v1002
        %1045 = vst [vmem:[%s271 + $0xe8] sm:$0xff] %v1005
        %1046 = vst [vmem:[%s271 + $0xf0] sm:$0xff] %v1010
        %1047 = vst [vmem:[%s271 + $0xf8] sm:$0xff] %v1013
        %s1048 = sand.u32 %s141, 1
        %s1049 = scalar_lea.sflag [#allocation4], %s1048
        %s1050 = sand.u32 %s141, 1
        %s1051 = smul.addr %s1050, 256
        %s1052 = scalar_lea.vmem [#allocation8], %s1051
        // Predicated region
        $region53: #{tpu_custom_call.1} parent=39 // pred_check
          %p1053 = pneg %p151
        $region54: #{tpu_custom_call.1} parent=39 // pred_check_branch
          %1055 = sbr.rel (%p1053) target = $region56
        $region55: #{tpu_custom_call.1} parent=39 // pred_region
          %s1056 = smul.u32 32, %s23
          %s1058 = ssub.s32 4096, 4096
          %1059 = vsyncadd %s1049, %s1058
          %s1060 = smul.addr %s1056, 128
          %s1061 = scalar_lea.hbm %s5, %s1060
          %s1062 = sshll.u32 %s1052, 4
          %s1063 = int_to_ptr.vmem [resolvable:$true] %s1062
          %1068 = dma.vmem_to_hbm [thread:$0]  %s1063, 4096, %s1061, %s1049, 128, 128, 8
        $region56: #{tpu_custom_call.1} parent=39 // pred_fallthru
          _
      $region40: #{tpu_custom_call.1} parent=5 // pred_fallthru
        _
      %p1069 = scmp.le.s32.totalorder 2, %s18
      // Predicated region
      $region57: #{tpu_custom_call.1} parent=5 // pred_check
        %p1070 = pneg %p1069
      $region58: #{tpu_custom_call.1} parent=5 // pred_check_branch
        %1072 = sbr.rel (%p1070) target = $region60
      $region59: #{tpu_custom_call.1} parent=5 // pred_region
        %s1073 = ssub.s32 %s18, 2
        // Predicated region
        $region61: #{tpu_custom_call.1} parent=59 // pred_check
          %p1074 = pneg %p157
        $region62: #{tpu_custom_call.1} parent=59 // pred_check_branch
          %1076 = sbr.rel (%p1074) target = $region64
        $region63: #{tpu_custom_call.1} parent=59 // pred_region
          %s1077 = sand.u32 %s142, 1
          %s1078 = scalar_lea.sflag [#allocation4], %s1077
          %s1079 = sand.u32 %s142, 1
          %s1080 = smul.addr %s1079, 256
          %s1081 = scalar_lea.vmem [#allocation8], %s1080
          %1082 = dma.done %s1078, 4096
        $region64: #{tpu_custom_call.1} parent=59 // pred_fallthru
          _
      $region60: #{tpu_custom_call.1} parent=5 // pred_fallthru
        _
    $region6: #{tpu_custom_call.1} parent=1 // loop_footer
      %s22 = sadd.s32 1, %s18
    $region7: #{tpu_custom_call.1} parent=1 // loop_footer_branch
      %17 = sbr.rel target = $region3
    $region8: #{tpu_custom_call.1} parent=1 // loop_exit
      _
    %1083 = vsyncpa [#allocation3], 1
    %s1084 = scalar_lea.sflag [#allocation3], 1
    %1085 = vsyncpa %s1084, 1
    %1086 = vsyncpa [#allocation6], 1
    %1087 = vsyncpa [#allocation4], 1
    %s1088 = scalar_lea.sflag [#allocation4], 1
    %1089 = vsyncpa %s1088, 1

</llo_original>
